<compile_context>
chip_gen: v7x
topology: tpu7x:2x2x1
jax: 0.10.0
libtpu: 0.0.40
codegen_flags: <defaults>
</compile_context>

<pallas_src>
import functools
import math

import jax
import jax.numpy as jnp
import numpy as np
from jax.experimental import pallas as pl
from jax.experimental.pallas import tpu as pltpu

# Large-but-finite mask value (flash-attention trick): avoids inf-inf NaN
# hazards while still underflowing to exactly 0 after exp().  NOTE: rows that
# are *fully* masked therefore yield a uniform distribution instead of the
# NaNs PyTorch's -inf masked_fill + softmax would produce.
_MASK_VALUE = -0.7 * float(np.finfo(np.float32).max)


def _sdpa_kernel(*refs, scale, has_mask, emit_attn):
    q_ref, k_ref, v_ref = refs[0], refs[1], refs[2]
    idx = 3
    mask_ref = None
    if has_mask:
        mask_ref = refs[idx]
        idx += 1
    ctx_ref = refs[idx]
    attn_ref = refs[idx + 1] if emit_attn else None

    # Fold 1/sqrt(dim) into the small (block_q, d) q tile (native dtype).
    q = q_ref[0] * jnp.asarray(scale, dtype=q_ref.dtype)   # (block_q, d)
    k = k_ref[0]                                            # (k_len, d)

    # scores = q @ k^T — contract the shared d axis directly ("nt" matmul on
    # the MXU, no in-kernel transpose of k), f32 accumulation.
    scores = jax.lax.dot_general(
        q, k, (((1,), (1,)), ((), ())),
        preferred_element_type=jnp.float32)                 # (block_q, k_len) f32

    if has_mask:
        # int8 mask: nonzero => masked position.
        scores = jnp.where(mask_ref[0] != 0, _MASK_VALUE, scores)

    # Numerically stable softmax in f32 (mandatory on v5e: no bf16 VPU/EUP).
    m = jnp.max(scores, axis=-1, keepdims=True)
    p = jnp.exp(scores - m)
    denom = jnp.sum(p, axis=-1, keepdims=True)
    attn = p * pl.reciprocal(denom, approx=True)            # EUP vrcp

    # PV matmul in the value dtype (bf16 MXU path when inputs are bf16).
    ctx = jnp.dot(attn.astype(v_ref.dtype), v_ref[0],
                  preferred_element_type=jnp.float32)

    ctx_ref[0] = ctx.astype(ctx_ref.dtype)
    if emit_attn:
        attn_ref[0] = attn.astype(attn_ref.dtype)


def _vmem_budget_bytes(block_q, k_len, d, d_v, q_dt, k_dt, v_dt,
                       ctx_dt, attn_dt, has_mask, emit_attn):
    """Per-step VMEM footprint (double-buffered pipeline) + f32 temporaries."""
    def nbytes(shape, dt):
        return int(np.prod(shape)) * np.dtype(dt).itemsize
    buf = 0
    buf += 2 * nbytes((block_q, d), q_dt)
    buf += 2 * nbytes((k_len, d), k_dt)
    buf += 2 * nbytes((k_len, d_v), v_dt)
    if has_mask:
        buf += 2 * nbytes((block_q, k_len), jnp.int8)
    buf += 2 * nbytes((block_q, d_v), ctx_dt)
    if emit_attn:
        buf += 2 * nbytes((block_q, k_len), attn_dt)
    buf += 2 * nbytes((block_q, k_len), jnp.float32)   # score/softmax temps
    return buf


def scaled_dot_product_attention(query, key, value, mask=None, *,
                                 dim=None, block_q=256, return_attn=True):
    """Returns (context, attn), mirroring the PyTorch module.

    attn is returned in query.dtype (like torch softmax); pass
    return_attn=False to skip the attn writeback entirely.
    """
    B, q_len, d = query.shape
    Bk, k_len, dk = key.shape
    Bv, v_len, d_v = value.shape
    assert (B, d) == (Bk, dk), "query/key shape mismatch"
    assert (B, k_len) == (Bv, v_len), "key/value shape mismatch"
    if dim is None:
        dim = d
    scale = 1.0 / math.sqrt(dim)

    block_q = min(block_q, q_len)
    if q_len % block_q:
        block_q = math.gcd(q_len, block_q)
    grid = (B, q_len // block_q)

    in_specs = [
        pl.BlockSpec((1, block_q, d), lambda b, i: (b, i, 0)),   # q tile
        pl.BlockSpec((1, k_len, d),   lambda b, i: (b, 0, 0)),   # full k (per batch)
        pl.BlockSpec((1, k_len, d_v), lambda b, i: (b, 0, 0)),   # full v (per batch)
    ]
    args = [query, key, value]

    has_mask = mask is not None
    if has_mask:
        # masked_fill(mask.view(score.size()), -inf) -> int8 (1=mask) stream,
        # applied in-kernel.  1 byte/elem instead of a 4-byte f32 bias.
        mask_i8 = jnp.reshape(mask, (B, q_len, k_len)).astype(jnp.int8)
        in_specs.append(pl.BlockSpec((1, block_q, k_len), lambda b, i: (b, i, 0)))
        args.append(mask_i8)

    attn_dtype = query.dtype
    out_shape = [jax.ShapeDtypeStruct((B, q_len, d_v), query.dtype)]     # context
    out_specs = [pl.BlockSpec((1, block_q, d_v), lambda b, i: (b, i, 0))]
    if return_attn:
        out_shape.append(jax.ShapeDtypeStruct((B, q_len, k_len), attn_dtype))
        out_specs.append(pl.BlockSpec((1, block_q, k_len), lambda b, i: (b, i, 0)))

    vmem_bytes = _vmem_budget_bytes(
        block_q, k_len, d, d_v, query.dtype, key.dtype, value.dtype,
        query.dtype, attn_dtype, has_mask, return_attn)
    vmem_limit = int(min(max(vmem_bytes + (4 << 20), 16 << 20), 64 << 20))

    kernel = functools.partial(_sdpa_kernel, scale=scale, has_mask=has_mask,
                               emit_attn=return_attn)
    outs = pl.pallas_call(
        kernel,
        out_shape=tuple(out_shape),
        grid_spec=pltpu.PrefetchScalarGridSpec(
            num_scalar_prefetch=0,
            grid=grid,
            in_specs=in_specs,
            out_specs=tuple(out_specs),
        ),
        compiler_params=pltpu.CompilerParams(
            dimension_semantics=("parallel", "parallel"),
            vmem_limit_bytes=vmem_limit),
    )(*args)

    if return_attn:
        return outs[0], outs[1]
    return outs[0], None


def _reference(query, key, value, mask=None, dim=None):
    """Pure-JAX reference mirroring the PyTorch forward."""
    if dim is None:
        dim = query.shape[-1]
    hp = jax.lax.Precision.HIGHEST
    score = jnp.einsum('bqd,bkd->bqk', query, key, precision=hp) / math.sqrt(dim)
    if mask is not None:
        score = jnp.where(mask, -jnp.inf, score)
    attn = jax.nn.softmax(score, axis=-1)
    ctx = jnp.einsum('bqk,bkd->bqd', attn, value, precision=hp)
    return ctx, attn


if __name__ == "__main__":
    root = jax.random.PRNGKey(0)
    kq, kk, kv, km = jax.random.split(root, 4)

    B, Q, K, D = 2, 256, 128, 128
    q = jax.random.normal(kq, (B, Q, D), jnp.float32)
    k = jax.random.normal(kk, (B, K, D), jnp.float32)
    v = jax.random.normal(kv, (B, K, D), jnp.float32)

    # --- unmasked ----------------------------------------------------------
    ctx, attn = jax.block_until_ready(scaled_dot_product_attention(q, k, v))
    assert ctx.shape == (B, Q, D) and attn.shape == (B, Q, K)
    ref_ctx, ref_attn = jax.block_until_ready(_reference(q, k, v))
    np.testing.assert_allclose(np.asarray(ctx), np.asarray(ref_ctx),
                               rtol=2e-3, atol=1e-4)
    np.testing.assert_allclose(np.asarray(attn), np.asarray(ref_attn),
                               rtol=2e-3, atol=1e-4)

    # --- masked ------------------------------------------------------------
    mask = jax.random.uniform(km, (B, Q, K)) < 0.15
    mask = mask.at[:, :, 0].set(False)   # keep >=1 unmasked key per row
    ctx_m, attn_m = jax.block_until_ready(
        scaled_dot_product_attention(q, k, v, mask))
    ref_ctx_m, ref_attn_m = jax.block_until_ready(_reference(q, k, v, mask))
    np.testing.assert_allclose(np.asarray(ctx_m), np.asarray(ref_ctx_m),
                               rtol=2e-3, atol=1e-4)
    np.testing.assert_allclose(np.asarray(attn_m), np.asarray(ref_attn_m),
                               rtol=2e-3, atol=1e-4)

    # --- context-only path (attn writeback skipped) ------------------------
    ctx_only, none_attn = jax.block_until_ready(
        scaled_dot_product_attention(q, k, v, mask, return_attn=False))
    assert none_attn is None
    np.testing.assert_allclose(np.asarray(ctx_only), np.asarray(ref_ctx_m),
                               rtol=2e-3, atol=1e-4)

    print("KERNEL_OK")
</pallas_src>

<mosaic_0001>
module attributes {stable_mosaic.version = 11 : i64} {
  func.func @_sdpa_kernel(%arg0: i32, %arg1: i32, %arg2: memref<1x256x128xf32, #tpu.memory_space<vmem>>, %arg3: memref<1x128x128xf32, #tpu.memory_space<vmem>>, %arg4: memref<1x128x128xf32, #tpu.memory_space<vmem>>, %arg5: memref<1x256x128xf32, #tpu.memory_space<vmem>>, %arg6: memref<1x256x128xf32, #tpu.memory_space<vmem>>) attributes {dimension_semantics = [#tpu.dimension_semantics<parallel>, #tpu.dimension_semantics<parallel>], iteration_bounds = array<i64: 2, 1>, scalar_prefetch = 0 : i64, scratch_operands = 0 : i64, tpu.core_type = #tpu.core_type<tc>, window_params = [{transform_indices = @transform_0, window_bounds = array<i64: 1, 256, 128>}, {transform_indices = @transform_1, window_bounds = array<i64: 1, 128, 128>}, {transform_indices = @transform_2, window_bounds = array<i64: 1, 128, 128>}, {transform_indices = @transform_3, window_bounds = array<i64: 1, 256, 128>}, {transform_indices = @transform_4, window_bounds = array<i64: 1, 256, 128>}]} {
    %c0 = arith.constant 0 : index
    %c0_0 = arith.constant 0 : index
    %c0_1 = arith.constant 0 : index
    %0 = vector.load %arg2[%c0, %c0_0, %c0_1] : memref<1x256x128xf32, #tpu.memory_space<vmem>>, vector<1x256x128xf32>
    %1 = vector.shape_cast %0 : vector<1x256x128xf32> to vector<256x128xf32>
    %cst = arith.constant 0.0883883461 : f32
    %2 = vector.broadcast %cst : f32 to vector<256x128xf32>
    %3 = arith.mulf %1, %2 : vector<256x128xf32>
    %c0_2 = arith.constant 0 : index
    %c0_3 = arith.constant 0 : index
    %c0_4 = arith.constant 0 : index
    %4 = vector.load %arg3[%c0_2, %c0_3, %c0_4] : memref<1x128x128xf32, #tpu.memory_space<vmem>>, vector<1x128x128xf32>
    %5 = vector.shape_cast %4 : vector<1x128x128xf32> to vector<128x128xf32>
    %cst_5 = arith.constant dense<0.000000e+00> : vector<256x128xf32>
    %6 = tpu.matmul %3, %5, %cst_5 {dimension_numbers = #tpu.dot_dimension_numbers<[1], [1], [0], [0], [0, 0, 1, 0], [], []>} : vector<256x128xf32>, vector<128x128xf32>, vector<256x128xf32> -> vector<256x128xf32>
    %cst_6 = arith.constant dense<0xFF800000> : vector<256xf32>
    %7 = vector.multi_reduction <maximumf>, %6, %cst_6 [1] : vector<256x128xf32> to vector<256xf32>
    %8 = vector.shape_cast %7 : vector<256xf32> to vector<256x1xf32>
    %9 = vector.broadcast %8 : vector<256x1xf32> to vector<256x128xf32>
    %10 = arith.subf %6, %9 : vector<256x128xf32>
    %11 = math.exp %10 : vector<256x128xf32>
    %cst_7 = arith.constant dense<0.000000e+00> : vector<256xf32>
    %12 = vector.multi_reduction <add>, %11, %cst_7 [1] : vector<256x128xf32> to vector<256xf32>
    %13 = vector.shape_cast %12 : vector<256xf32> to vector<256x1xf32>
    %14 = tpu.reciprocal %13 {approx = true} : vector<256x1xf32> -> vector<256x1xf32>
    %15 = vector.broadcast %14 : vector<256x1xf32> to vector<256x128xf32>
    %16 = arith.mulf %11, %15 : vector<256x128xf32>
    %c0_8 = arith.constant 0 : index
    %c0_9 = arith.constant 0 : index
    %c0_10 = arith.constant 0 : index
    %17 = vector.load %arg4[%c0_8, %c0_9, %c0_10] : memref<1x128x128xf32, #tpu.memory_space<vmem>>, vector<1x128x128xf32>
    %18 = vector.shape_cast %17 : vector<1x128x128xf32> to vector<128x128xf32>
    %cst_11 = arith.constant dense<0.000000e+00> : vector<256x128xf32>
    %19 = tpu.matmul %16, %18, %cst_11 {dimension_numbers = #tpu.dot_dimension_numbers<[1], [0], [0], [1], [0, 0, 1, 1], [], []>} : vector<256x128xf32>, vector<128x128xf32>, vector<256x128xf32> -> vector<256x128xf32>
    %c0_12 = arith.constant 0 : index
    %c0_13 = arith.constant 0 : index
    %c0_14 = arith.constant 0 : index
    %20 = vector.load %arg5[%c0_12, %c0_13, %c0_14] : memref<1x256x128xf32, #tpu.memory_space<vmem>>, vector<1x256x128xf32>
    %21 = vector.shape_cast %20 : vector<1x256x128xf32> to vector<256x128xf32>
    %22 = vector.shape_cast %19 : vector<256x128xf32> to vector<1x256x128xf32>
    tpu.vector_store %arg5[%c0_12, %c0_13, %c0_14], %22 {strides = array<i32>} : memref<1x256x128xf32, #tpu.memory_space<vmem>>, vector<1x256x128xf32>,
    %c0_15 = arith.constant 0 : index
    %c0_16 = arith.constant 0 : index
    %c0_17 = arith.constant 0 : index
    %23 = vector.load %arg6[%c0_15, %c0_16, %c0_17] : memref<1x256x128xf32, #tpu.memory_space<vmem>>, vector<1x256x128xf32>
    %24 = vector.shape_cast %23 : vector<1x256x128xf32> to vector<256x128xf32>
    %25 = vector.shape_cast %16 : vector<256x128xf32> to vector<1x256x128xf32>
    tpu.vector_store %arg6[%c0_15, %c0_16, %c0_17], %25 {strides = array<i32>} : memref<1x256x128xf32, #tpu.memory_space<vmem>>, vector<1x256x128xf32>,
    return
  }
  func.func @transform_0(%arg0: i32, %arg1: i32) -> (i32, i32, i32) {
    %c0_i32 = arith.constant 0 : i32
    %c0_i32_0 = arith.constant 0 : i32
    return %arg0, %arg1, %c0_i32 : i32, i32, i32
  }
  func.func @transform_1(%arg0: i32, %arg1: i32) -> (i32, i32, i32) {
    %c0_i32 = arith.constant 0 : i32
    %c0_i32_0 = arith.constant 0 : i32
    %c0_i32_1 = arith.constant 0 : i32
    return %arg0, %c0_i32, %c0_i32_0 : i32, i32, i32
  }
  func.func @transform_2(%arg0: i32, %arg1: i32) -> (i32, i32, i32) {
    %c0_i32 = arith.constant 0 : i32
    %c0_i32_0 = arith.constant 0 : i32
    %c0_i32_1 = arith.constant 0 : i32
    return %arg0, %c0_i32, %c0_i32_0 : i32, i32, i32
  }
  func.func @transform_3(%arg0: i32, %arg1: i32) -> (i32, i32, i32) {
    %c0_i32 = arith.constant 0 : i32
    %c0_i32_0 = arith.constant 0 : i32
    return %arg0, %arg1, %c0_i32 : i32, i32, i32
  }
  func.func @transform_4(%arg0: i32, %arg1: i32) -> (i32, i32, i32) {
    %c0_i32 = arith.constant 0 : i32
    %c0_i32_0 = arith.constant 0 : i32
    return %arg0, %arg1, %c0_i32 : i32, i32, i32
  }
}

</mosaic_0001>

<llo_original>
// kernel: tpu_custom_call.1
$region0: #{tpu_custom_call.1}
  #allocation0 [shape = 'u32[]', space=smem, size = 0x4, offset = 0x4, fixed_abs, tag = 'smem constant byte address 0x4 - core index']
  #allocation1 [shape = 'u32[144,128]{1,0:T(1,128)}', space=vmem, size = 0x12000, scoped, tag = 'internal scratch']
  %s0 = inlined_call_operand.hbm [shape: f32[2,256,128], index: 0, kind: input, shape index: {}]
  %s1 = inlined_call_operand.hbm [shape: f32[2,128,128], index: 1, kind: input, shape index: {}]
  %s2 = inlined_call_operand.hbm [shape: f32[2,128,128], index: 2, kind: input, shape index: {}]
  %s3 = inlined_call_operand.hbm [shape: f32[2,256,128], index: 3, kind: output, shape index: {0}]
  %s4 = inlined_call_operand.hbm [shape: f32[2,256,128], index: 4, kind: output, shape index: {1}]
  %5 = xla_tuple %s3, %s4
  %s6 = sld [smem:[#allocation0]]
  $region65: #{tpu_custom_call.1} parent=0
    _
  %s8 = ssub.s32 1, %s6
  %s9 = scalar_select 0, %s8, %s6
  $region1: #{tpu_custom_call.1} parent=0
    #allocation2 [shape = 'u8[262144]{0}', space=vmem, size = 0x40000, scoped, tag = 'input window, operand 0']
    #allocation3 [shape = 's32[2]{0}', space=sflag, size = 0x8, scoped, tag = 'scoped memory for tpu_custom_call.1']
    #allocation4 [shape = 's32[2]{0}', space=sflag, size = 0x8, scoped, tag = 'scoped memory for tpu_custom_call.1']
    #allocation5 [shape = 'u8[131072]{0}', space=vmem, size = 0x20000, scoped, tag = 'input window, operand 1']
    #allocation6 [shape = 's32[2]{0}', space=sflag, size = 0x8, scoped, tag = 'scoped memory for tpu_custom_call.1']
    #allocation7 [shape = 'u8[131072]{0}', space=vmem, size = 0x20000, scoped, tag = 'input window, operand 2']
    #allocation8 [shape = 'u8[262144]{0}', space=vmem, size = 0x40000, scoped, tag = 'output window, operand 0']
    #allocation9 [shape = 'u8[262144]{0}', space=vmem, size = 0x40000, scoped, tag = 'output window, operand 1']
    #allocation10 [shape = 's32[2]{0}', space=sflag, size = 0x8, scoped, tag = 'scoped memory for tpu_custom_call.1']
    %10 = vsyncpa [#allocation3], 0
    %s11 = scalar_lea.sflag [#allocation3], 1
    %12 = vsyncpa %s11, 0
    %13 = vsyncpa [#allocation6], 0
    %s14 = scalar_lea.sflag [#allocation6], 1
    %15 = vsyncpa %s14, 0
    %16 = vsyncpa [#allocation4], 0
    %s17 = scalar_lea.sflag [#allocation4], 1
    %18 = vsyncpa %s17, 0
    %19 = vsyncpa [#allocation10], 0
    %s20 = scalar_lea.sflag [#allocation10], 1
    %21 = vsyncpa %s20, 0
    loop: start=0, step=1, limit=4
    $region2: #{tpu_custom_call.1} parent=1 // loop_pre_header
      _
    $region3: #{tpu_custom_call.1} parent=1 // loop_header
      %s23 = sphi 0, %s27
      %p24 = scmp.ge.s32.totalorder %s23, 4
      %s30 = sphi 0, %s42
      %s31 = sphi 0, %s38
      %s32 = sphi 0, %s30
      %s33 = sphi 0, %s31
      %s34 = sphi 0, %s32
      %s35 = sphi 0, %s33
      %s47 = sphi 0, %s49
      %s50 = sphi 0, %s47
      %s51 = sphi 0, %s50
      %s67 = sphi 0, %s51
      %s73 = sphi 0, %s75
      %s76 = sphi 0, %s73
      %s77 = sphi 0, %s76
      %s93 = sphi 0, %s77
      %s99 = sphi 0, %s101
      %s102 = sphi 0, %s99
      %s103 = sphi 0, %s102
      %s119 = sphi 0, %s103
      %s127 = sphi 0, %s129
      %s130 = sphi 0, %s127
      %s131 = sphi 0, %s130
      %s147 = sphi 0, %s131
      %s155 = sphi 0, %s157
      %s158 = sphi 0, %s155
      %s159 = sphi 0, %s158
      %s175 = sphi 0, %s159
    $region4: #{tpu_custom_call.1} parent=1 // loop_header_branch
      %26 = sbr.rel (%p24) target = $region8
    $region5: #{tpu_custom_call.1} parent=1 // loop_body
      %s28 = ssub.s32 %s23, 1
      %s29 = ssub.s32 %s23, 2
      %s36 = sadd.s32 1, %s31
      %p37 = scmp.ge.s32.totalorder %s36, 1
      %s38 = scalar_select %p37, 0, %s36
      %s39 = sadd.s32 1, %s30
      %s40 = scalar_select %p37, %s39, %s30
      %p41 = scmp.ge.s32.totalorder %s40, 2
      %s42 = scalar_select %p41, 0, %s40
      %s43 = ssub.s32 %s30, %s42
      %s44 = ssub.s32 %s31, %s38
      %s45 = sor.u32 %s43, %s44
      %p46 = scmp.eq.s32.totalorder %s45, 0
      %s48 = sadd.s32 %s47, 1
      %s49 = scalar_select %p46, %s47, %s48
      %p52 = pneg %p46
      %p53 = scmp.eq.s32.totalorder %s23, 1
      %p54 = por %p52, %p53
      %p55 = scmp.ne.s32.totalorder %s47, %s50
      %p56 = scmp.eq.s32.totalorder %s23, 0
      %p57 = por %p55, %p56
      %p58 = scmp.ne.s32.totalorder %s47, %s50
      %p59 = scmp.eq.s32.totalorder %s28, 1
      %p60 = por %p58, %p59
      %p61 = scmp.ne.s32.totalorder %s50, %s51
      %p62 = scmp.eq.s32.totalorder %s28, 0
      %p63 = por %p61, %p62
      %p64 = scmp.ne.s32.totalorder %s50, %s51
      %p65 = scmp.eq.s32.totalorder %s29, 1
      %p66 = por %p64, %p65
      %p68 = scmp.ne.s32.totalorder %s51, %s67
      %p69 = scmp.eq.s32.totalorder %s29, 0
      %p70 = por %p68, %p69
      %s71 = ssub.s32 %s30, %s42
      %p72 = scmp.eq.s32.totalorder %s71, 0
      %s74 = sadd.s32 %s73, 1
      %s75 = scalar_select %p72, %s73, %s74
      %p78 = pneg %p72
      %p79 = scmp.eq.s32.totalorder %s23, 1
      %p80 = por %p78, %p79
      %p81 = scmp.ne.s32.totalorder %s73, %s76
      %p82 = scmp.eq.s32.totalorder %s23, 0
      %p83 = por %p81, %p82
      %p84 = scmp.ne.s32.totalorder %s73, %s76
      %p85 = scmp.eq.s32.totalorder %s28, 1
      %p86 = por %p84, %p85
      %p87 = scmp.ne.s32.totalorder %s76, %s77
      %p88 = scmp.eq.s32.totalorder %s28, 0
      %p89 = por %p87, %p88
      %p90 = scmp.ne.s32.totalorder %s76, %s77
      %p91 = scmp.eq.s32.totalorder %s29, 1
      %p92 = por %p90, %p91
      %p94 = scmp.ne.s32.totalorder %s77, %s93
      %p95 = scmp.eq.s32.totalorder %s29, 0
      %p96 = por %p94, %p95
      %s97 = ssub.s32 %s30, %s42
      %p98 = scmp.eq.s32.totalorder %s97, 0
      %s100 = sadd.s32 %s99, 1
      %s101 = scalar_select %p98, %s99, %s100
      %p104 = pneg %p98
      %p105 = scmp.eq.s32.totalorder %s23, 1
      %p106 = por %p104, %p105
      %p107 = scmp.ne.s32.totalorder %s99, %s102
      %p108 = scmp.eq.s32.totalorder %s23, 0
      %p109 = por %p107, %p108
      %p110 = scmp.ne.s32.totalorder %s99, %s102
      %p111 = scmp.eq.s32.totalorder %s28, 1
      %p112 = por %p110, %p111
      %p113 = scmp.ne.s32.totalorder %s102, %s103
      %p114 = scmp.eq.s32.totalorder %s28, 0
      %p115 = por %p113, %p114
      %p116 = scmp.ne.s32.totalorder %s102, %s103
      %p117 = scmp.eq.s32.totalorder %s29, 1
      %p118 = por %p116, %p117
      %p120 = scmp.ne.s32.totalorder %s103, %s119
      %p121 = scmp.eq.s32.totalorder %s29, 0
      %p122 = por %p120, %p121
      %s123 = ssub.s32 %s30, %s42
      %s124 = ssub.s32 %s31, %s38
      %s125 = sor.u32 %s123, %s124
      %p126 = scmp.eq.s32.totalorder %s125, 0
      %s128 = sadd.s32 %s127, 1
      %s129 = scalar_select %p126, %s127, %s128
      %p132 = pneg %p126
      %p133 = scmp.eq.s32.totalorder %s23, 1
      %p134 = por %p132, %p133
      %p135 = scmp.ne.s32.totalorder %s127, %s130
      %p136 = scmp.eq.s32.totalorder %s23, 0
      %p137 = por %p135, %p136
      %p138 = scmp.ne.s32.totalorder %s127, %s130
      %p139 = scmp.eq.s32.totalorder %s28, 1
      %p140 = por %p138, %p139
      %p141 = scmp.ne.s32.totalorder %s130, %s131
      %p142 = scmp.eq.s32.totalorder %s28, 0
      %p143 = por %p141, %p142
      %p144 = scmp.ne.s32.totalorder %s130, %s131
      %p145 = scmp.eq.s32.totalorder %s29, 1
      %p146 = por %p144, %p145
      %p148 = scmp.ne.s32.totalorder %s131, %s147
      %p149 = scmp.eq.s32.totalorder %s29, 0
      %p150 = por %p148, %p149
      %s151 = ssub.s32 %s30, %s42
      %s152 = ssub.s32 %s31, %s38
      %s153 = sor.u32 %s151, %s152
      %p154 = scmp.eq.s32.totalorder %s153, 0
      %s156 = sadd.s32 %s155, 1
      %s157 = scalar_select %p154, %s155, %s156
      %p160 = pneg %p154
      %p161 = scmp.eq.s32.totalorder %s23, 1
      %p162 = por %p160, %p161
      %p163 = scmp.ne.s32.totalorder %s155, %s158
      %p164 = scmp.eq.s32.totalorder %s23, 0
      %p165 = por %p163, %p164
      %p166 = scmp.ne.s32.totalorder %s155, %s158
      %p167 = scmp.eq.s32.totalorder %s28, 1
      %p168 = por %p166, %p167
      %p169 = scmp.ne.s32.totalorder %s158, %s159
      %p170 = scmp.eq.s32.totalorder %s28, 0
      %p171 = por %p169, %p170
      %p172 = scmp.ne.s32.totalorder %s158, %s159
      %p173 = scmp.eq.s32.totalorder %s29, 1
      %p174 = por %p172, %p173
      %p176 = scmp.ne.s32.totalorder %s159, %s175
      %p177 = scmp.eq.s32.totalorder %s29, 0
      %p178 = por %p176, %p177
      %p179 = scmp.le.s32.totalorder 1, %s23
      %p180 = scmp.lt.s32.totalorder %s23, 3
      %p181 = pnand %p179, %p180
      %p182 = pneg %p181
      // Predicated region
      $region9: #{tpu_custom_call.1} parent=5 // pred_check
        _
      $region10: #{tpu_custom_call.1} parent=5 // pred_check_branch
        %184 = sbr.rel (%p181) target = $region12
      $region11: #{tpu_custom_call.1} parent=5 // pred_region
        %s185 = ssub.s32 %s23, 1
      $region12: #{tpu_custom_call.1} parent=5 // pred_fallthru
        _
      %p186 = scmp.lt.s32.totalorder %s23, 2
      // Predicated region
      $region13: #{tpu_custom_call.1} parent=5 // pred_check
        %p187 = pneg %p186
      $region14: #{tpu_custom_call.1} parent=5 // pred_check_branch
        %189 = sbr.rel (%p187) target = $region16
      $region15: #{tpu_custom_call.1} parent=5 // pred_region
        // Predicated region
        $region17: #{tpu_custom_call.1} parent=15 // pred_check
          %p190 = pneg %p57
        $region18: #{tpu_custom_call.1} parent=15 // pred_check_branch
          %192 = sbr.rel (%p190) target = $region20
        $region19: #{tpu_custom_call.1} parent=15 // pred_region
          %s193 = sand.u32 %s47, 1
          %s194 = scalar_lea.sflag [#allocation3], %s193
          %s195 = sand.u32 %s47, 1
          %s196 = smul.addr %s195, 256
          %s197 = scalar_lea.vmem [#allocation2], %s196
          %s198 = smul.u32 32, %s31
          %s200 = ssub.s32 4096, 4096
          %201 = vsyncadd %s194, %s200
          %s202 = smul.addr %s30, 32
          %s203 = sadd.s32 %s198, %s202
          %s204 = smul.addr %s203, 128
          %s205 = scalar_lea.hbm %s0, %s204
          %s206 = sshll.u32 %s197, 4
          %s207 = int_to_ptr.vmem [resolvable:$true] %s206
          %212 = dma.hbm_to_vmem [thread:$0]  %s205, 4096, %s207, %s194, 128, 128, 8
        $region20: #{tpu_custom_call.1} parent=15 // pred_fallthru
          _
        // Predicated region
        $region21: #{tpu_custom_call.1} parent=15 // pred_check
          %p213 = pneg %p83
        $region22: #{tpu_custom_call.1} parent=15 // pred_check_branch
          %215 = sbr.rel (%p213) target = $region24
        $region23: #{tpu_custom_call.1} parent=15 // pred_region
          %s216 = sand.u32 %s23, 1
          %s217 = scalar_lea.sflag [#allocation6], %s216
          %s218 = sand.u32 %s73, 1
          %s219 = smul.addr %s218, 128
          %s220 = scalar_lea.vmem [#allocation5], %s219
          %s222 = ssub.s32 2048, 2048
          %223 = vsyncadd %s217, %s222
          %s224 = smul.addr %s30, 16
          %s225 = smul.addr %s224, 128
          %s226 = scalar_lea.hbm %s1, %s225
          %s227 = sshll.u32 %s220, 4
          %s228 = int_to_ptr.vmem [resolvable:$true] %s227
          %233 = dma.hbm_to_vmem [thread:$0]  %s226, 2048, %s228, %s217, 128, 128, 8
        $region24: #{tpu_custom_call.1} parent=15 // pred_fallthru
          _
        // Predicated region
        $region25: #{tpu_custom_call.1} parent=15 // pred_check
          %p234 = pneg %p109
        $region26: #{tpu_custom_call.1} parent=15 // pred_check_branch
          %236 = sbr.rel (%p234) target = $region28
        $region27: #{tpu_custom_call.1} parent=15 // pred_region
          %s237 = sand.u32 %s23, 1
          %s238 = scalar_lea.sflag [#allocation6], %s237
          %s239 = sand.u32 %s99, 1
          %s240 = smul.addr %s239, 128
          %s241 = scalar_lea.vmem [#allocation7], %s240
          %s243 = ssub.s32 2048, 2048
          %244 = vsyncadd %s238, %s243
          %s245 = smul.addr %s30, 16
          %s246 = smul.addr %s245, 128
          %s247 = scalar_lea.hbm %s2, %s246
          %s248 = sshll.u32 %s241, 4
          %s249 = int_to_ptr.vmem [resolvable:$true] %s248
          %254 = dma.hbm_to_vmem [thread:$0]  %s247, 2048, %s249, %s238, 128, 128, 8
        $region28: #{tpu_custom_call.1} parent=15 // pred_fallthru
          _
      $region16: #{tpu_custom_call.1} parent=5 // pred_fallthru
        _
      %p255 = scmp.le.s32.totalorder 1, %s23
      %p256 = scmp.lt.s32.totalorder %s23, 3
      %p257 = pnand %p255, %p256
      %p258 = pneg %p257
      // Predicated region
      $region29: #{tpu_custom_call.1} parent=5 // pred_check
        _
      $region30: #{tpu_custom_call.1} parent=5 // pred_check_branch
        %260 = sbr.rel (%p257) target = $region32
      $region31: #{tpu_custom_call.1} parent=5 // pred_region
        %s261 = ssub.s32 %s23, 1
        %s262 = sand.u32 %s50, 1
        %s263 = scalar_lea.sflag [#allocation3], %s262
        %s264 = sand.u32 %s50, 1
        %s265 = smul.addr %s264, 256
        %s266 = scalar_lea.vmem [#allocation2], %s265
        // Predicated region
        $region33: #{tpu_custom_call.1} parent=31 // pred_check
          %p267 = pneg %p63
        $region34: #{tpu_custom_call.1} parent=31 // pred_check_branch
          %269 = sbr.rel (%p267) target = $region36
        $region35: #{tpu_custom_call.1} parent=31 // pred_region
          %270 = dma.done %s263, 4096
        $region36: #{tpu_custom_call.1} parent=31 // pred_fallthru
          _
        %s271 = sand.u32 %s28, 1
        %s272 = scalar_lea.sflag [#allocation6], %s271
        %s273 = sand.u32 %s76, 1
        %s274 = smul.addr %s273, 128
        %s275 = scalar_lea.vmem [#allocation5], %s274
        // Predicated region
        $region37: #{tpu_custom_call.1} parent=31 // pred_check
          %p276 = pneg %p89
        $region38: #{tpu_custom_call.1} parent=31 // pred_check_branch
          %278 = sbr.rel (%p276) target = $region40
        $region39: #{tpu_custom_call.1} parent=31 // pred_region
          %279 = dma.done %s272, 2048
        $region40: #{tpu_custom_call.1} parent=31 // pred_fallthru
          _
        %s280 = sand.u32 %s28, 1
        %s281 = scalar_lea.sflag [#allocation6], %s280
        %s282 = sand.u32 %s102, 1
        %s283 = smul.addr %s282, 128
        %s284 = scalar_lea.vmem [#allocation7], %s283
        // Predicated region
        $region41: #{tpu_custom_call.1} parent=31 // pred_check
          %p285 = pneg %p115
        $region42: #{tpu_custom_call.1} parent=31 // pred_check_branch
          %287 = sbr.rel (%p285) target = $region44
        $region43: #{tpu_custom_call.1} parent=31 // pred_region
          %288 = dma.done %s281, 2048
        $region44: #{tpu_custom_call.1} parent=31 // pred_fallthru
          _
        %s289 = sand.u32 %s50, 1
        %s290 = scalar_lea.sflag [#allocation3], %s289
        %s291 = sand.u32 %s50, 1
        %s292 = smul.addr %s291, 256
        %s293 = scalar_lea.vmem [#allocation2], %s292
        %p294 = pneg %p63
        %p295 = pneg %p60
        %s296 = sand.u32 %s28, 1
        %s297 = scalar_lea.sflag [#allocation6], %s296
        %s298 = sand.u32 %s76, 1
        %s299 = smul.addr %s298, 128
        %s300 = scalar_lea.vmem [#allocation5], %s299
        %p301 = pneg %p89
        %p302 = pneg %p86
        %s303 = sand.u32 %s28, 1
        %s304 = scalar_lea.sflag [#allocation6], %s303
        %s305 = sand.u32 %s102, 1
        %s306 = smul.addr %s305, 128
        %s307 = scalar_lea.vmem [#allocation7], %s306
        %p308 = pneg %p115
        %p309 = pneg %p112
        %p310 = pneg %p143
        %p311 = pneg %p140
        %s312 = sand.u32 %s130, 1
        %s313 = scalar_lea.sflag [#allocation4], %s312
        %s314 = sand.u32 %s130, 1
        %s315 = smul.addr %s314, 256
        %s316 = scalar_lea.vmem [#allocation8], %s315
        %p317 = pneg %p171
        %p318 = pneg %p168
        %s319 = sand.u32 %s158, 1
        %s320 = scalar_lea.sflag [#allocation10], %s319
        %s321 = sand.u32 %s158, 1
        %s322 = smul.addr %s321, 256
        %s323 = scalar_lea.vmem [#allocation9], %s322
        %s324 = smul.u32 32, %s33
        %s325 = smul.u32 32, %s33
        %s326 = smul.u32 32, %s33
        %v327 = vld [vmem:[%s266] sm:$0xff]
        %v328 = vld [vmem:[%s266 + $0x8] sm:$0xff]
        %v329 = vld [vmem:[%s266 + $0x10] sm:$0xff]
        %v330 = vld [vmem:[%s266 + $0x18] sm:$0xff]
        %v331 = vld [vmem:[%s266 + $0x20] sm:$0xff]
        %v332 = vld [vmem:[%s266 + $0x28] sm:$0xff]
        %v333 = vld [vmem:[%s266 + $0x30] sm:$0xff]
        %v334 = vld [vmem:[%s266 + $0x38] sm:$0xff]
        %v335 = vld [vmem:[%s266 + $0x40] sm:$0xff]
        %v336 = vld [vmem:[%s266 + $0x48] sm:$0xff]
        %v337 = vld [vmem:[%s266 + $0x50] sm:$0xff]
        %v338 = vld [vmem:[%s266 + $0x58] sm:$0xff]
        %v339 = vld [vmem:[%s266 + $0x60] sm:$0xff]
        %v340 = vld [vmem:[%s266 + $0x68] sm:$0xff]
        %v341 = vld [vmem:[%s266 + $0x70] sm:$0xff]
        %v342 = vld [vmem:[%s266 + $0x78] sm:$0xff]
        %v343 = vld [vmem:[%s266 + $0x80] sm:$0xff]
        %v344 = vld [vmem:[%s266 + $0x88] sm:$0xff]
        %v345 = vld [vmem:[%s266 + $0x90] sm:$0xff]
        %v346 = vld [vmem:[%s266 + $0x98] sm:$0xff]
        %v347 = vld [vmem:[%s266 + $0xa0] sm:$0xff]
        %v348 = vld [vmem:[%s266 + $0xa8] sm:$0xff]
        %v349 = vld [vmem:[%s266 + $0xb0] sm:$0xff]
        %v350 = vld [vmem:[%s266 + $0xb8] sm:$0xff]
        %v351 = vld [vmem:[%s266 + $0xc0] sm:$0xff]
        %v352 = vld [vmem:[%s266 + $0xc8] sm:$0xff]
        %v353 = vld [vmem:[%s266 + $0xd0] sm:$0xff]
        %v354 = vld [vmem:[%s266 + $0xd8] sm:$0xff]
        %v355 = vld [vmem:[%s266 + $0xe0] sm:$0xff]
        %v356 = vld [vmem:[%s266 + $0xe8] sm:$0xff]
        %v357 = vld [vmem:[%s266 + $0xf0] sm:$0xff]
        %v358 = vld [vmem:[%s266 + $0xf8] sm:$0xff]
        %v359 = vmul.f32 %v327, 0.088388346
        %v360 = vmul.f32 %v328, 0.088388346
        %v361 = vmul.f32 %v329, 0.088388346
        %v362 = vmul.f32 %v330, 0.088388346
        %v363 = vmul.f32 %v331, 0.088388346
        %v364 = vmul.f32 %v332, 0.088388346
        %v365 = vmul.f32 %v333, 0.088388346
        %v366 = vmul.f32 %v334, 0.088388346
        %v367 = vmul.f32 %v335, 0.088388346
        %v368 = vmul.f32 %v336, 0.088388346
        %v369 = vmul.f32 %v337, 0.088388346
        %v370 = vmul.f32 %v338, 0.088388346
        %v371 = vmul.f32 %v339, 0.088388346
        %v372 = vmul.f32 %v340, 0.088388346
        %v373 = vmul.f32 %v341, 0.088388346
        %v374 = vmul.f32 %v342, 0.088388346
        %v375 = vmul.f32 %v343, 0.088388346
        %v376 = vmul.f32 %v344, 0.088388346
        %v377 = vmul.f32 %v345, 0.088388346
        %v378 = vmul.f32 %v346, 0.088388346
        %v379 = vmul.f32 %v347, 0.088388346
        %v380 = vmul.f32 %v348, 0.088388346
        %v381 = vmul.f32 %v349, 0.088388346
        %v382 = vmul.f32 %v350, 0.088388346
        %v383 = vmul.f32 %v351, 0.088388346
        %v384 = vmul.f32 %v352, 0.088388346
        %v385 = vmul.f32 %v353, 0.088388346
        %v386 = vmul.f32 %v354, 0.088388346
        %v387 = vmul.f32 %v355, 0.088388346
        %v388 = vmul.f32 %v356, 0.088388346
        %v389 = vmul.f32 %v357, 0.088388346
        %v390 = vmul.f32 %v358, 0.088388346
        %v391 = vld [vmem:[%s275] sm:$0xff]
        %v392 = vld [vmem:[%s275 + $0x8] sm:$0xff]
        %v393 = vld [vmem:[%s275 + $0x10] sm:$0xff]
        %v394 = vld [vmem:[%s275 + $0x18] sm:$0xff]
        %v395 = vld [vmem:[%s275 + $0x20] sm:$0xff]
        %v396 = vld [vmem:[%s275 + $0x28] sm:$0xff]
        %v397 = vld [vmem:[%s275 + $0x30] sm:$0xff]
        %v398 = vld [vmem:[%s275 + $0x38] sm:$0xff]
        %v399 = vld [vmem:[%s275 + $0x40] sm:$0xff]
        %v400 = vld [vmem:[%s275 + $0x48] sm:$0xff]
        %v401 = vld [vmem:[%s275 + $0x50] sm:$0xff]
        %v402 = vld [vmem:[%s275 + $0x58] sm:$0xff]
        %v403 = vld [vmem:[%s275 + $0x60] sm:$0xff]
        %v404 = vld [vmem:[%s275 + $0x68] sm:$0xff]
        %v405 = vld [vmem:[%s275 + $0x70] sm:$0xff]
        %v406 = vld [vmem:[%s275 + $0x78] sm:$0xff]
        %407 = vmatprep.subr.mxu0 0.0
        %408 = vmatpush1.xpose.msra.mxu0 %v391
        %409 = vmatprep.subr.mxu0 0.0
        %410 = vmatpush1.xpose.msra.mxu0 %v392
        %411 = vmatprep.subr.mxu0 0.0
        %412 = vmatpush1.xpose.msra.mxu0 %v393
        %413 = vmatprep.subr.mxu0 0.0
        %414 = vmatpush1.xpose.msra.mxu0 %v394
        %415 = vmatprep.subr.mxu0 0.0
        %416 = vmatpush1.xpose.msra.mxu0 %v395
        %417 = vmatprep.subr.mxu0 0.0
        %418 = vmatpush1.xpose.msra.mxu0 %v396
        %419 = vmatprep.subr.mxu0 0.0
        %420 = vmatpush1.xpose.msra.mxu0 %v397
        %421 = vmatprep.subr.mxu0 0.0
        %422 = vmatpush1.xpose.msra.mxu0 %v398
        %423 = vmatprep.subr.mxu0 0.0
        %424 = vmatpush1.xpose.msra.mxu0 %v399
        %425 = vmatprep.subr.mxu0 0.0
        %426 = vmatpush1.xpose.msra.mxu0 %v400
        %427 = vmatprep.subr.mxu0 0.0
        %428 = vmatpush1.xpose.msra.mxu0 %v401
        %429 = vmatprep.subr.mxu0 0.0
        %430 = vmatpush1.xpose.msra.mxu0 %v402
        %431 = vmatprep.subr.mxu0 0.0
        %432 = vmatpush1.xpose.msra.mxu0 %v403
        %433 = vmatprep.subr.mxu0 0.0
        %434 = vmatpush1.xpose.msra.mxu0 %v404
        %435 = vmatprep.subr.mxu0 0.0
        %436 = vmatpush1.xpose.msra.mxu0 %v405
        %437 = vmatprep.subr.mxu0 0.0
        %438 = vmatpush1.xpose.msra.mxu0 %v406
        %439 = vmatprep.subr.mxu0 0.0
        %440 = vmatpush1.xpose.msra.mxu0 0.0
        %441 = vmatprep.subr.mxu0 0.0
        %442 = vmatpush1.xpose.msra.mxu0 0.0
        %443 = vmatprep.subr.mxu0 0.0
        %444 = vmatpush1.xpose.msra.mxu0 0.0
        %445 = vmatprep.subr.mxu0 0.0
        %446 = vmatpush1.xpose.msra.mxu0 0.0
        %447 = vmatprep.subr.mxu0 0.0
        %448 = vmatpush1.xpose.msra.mxu0 0.0
        %449 = vmatprep.subr.mxu0 0.0
        %450 = vmatpush1.xpose.msra.mxu0 0.0
        %451 = vmatprep.subr.mxu0 0.0
        %452 = vmatpush1.xpose.msra.mxu0 0.0
        %453 = vmatprep.subr.mxu0 0.0
        %454 = vmatpush1.xpose.msra.mxu0 0.0
        %455 = vmatprep.subr.mxu0 0.0
        %456 = vmatpush1.xpose.msra.mxu0 0.0
        %457 = vmatprep.subr.mxu0 0.0
        %458 = vmatpush1.xpose.msra.mxu0 0.0
        %459 = vmatprep.subr.mxu0 0.0
        %460 = vmatpush1.xpose.msra.mxu0 0.0
        %461 = vmatprep.subr.mxu0 0.0
        %462 = vmatpush1.xpose.msra.mxu0 0.0
        %463 = vmatprep.subr.mxu0 0.0
        %464 = vmatpush1.xpose.msra.mxu0 0.0
        %465 = vmatprep.subr.mxu0 0.0
        %466 = vmatpush1.xpose.msra.mxu0 0.0
        %467 = vmatprep.subr.mxu0 0.0
        %468 = vmatpush1.xpose.msra.mxu0 0.0
        %469 = vmatprep.subr.mxu0 0.0
        %470 = vmatpush1.xpose.msra.mxu0 0.0
        %471 = vmatprep.mubr.f32.mxu0 0.0
        %472 = vmatmul.mubr.f32.gmra.mrb[0].mxu0 %v359
        %v473 = vpop.f32.mrb[0].mxu0
        %v474 = vadd.f32 0.0, %v473
        %v475 = vpop.f32.mrb[0].mxu0
        %476 = vmatprep.mubr.f32.mxu0 0.0
        %477 = vmatmul.mubr.f32.gmra.mrb[0].mxu0 %v360
        %v478 = vpop.f32.mrb[0].mxu0
        %v479 = vadd.f32 0.0, %v478
        %v480 = vpop.f32.mrb[0].mxu0
        %481 = vmatprep.mubr.f32.mxu0 0.0
        %482 = vmatmul.mubr.f32.gmra.mrb[0].mxu0 %v361
        %v483 = vpop.f32.mrb[0].mxu0
        %v484 = vadd.f32 0.0, %v483
        %v485 = vpop.f32.mrb[0].mxu0
        %486 = vmatprep.mubr.f32.mxu0 0.0
        %487 = vmatmul.mubr.f32.gmra.mrb[0].mxu0 %v362
        %v488 = vpop.f32.mrb[0].mxu0
        %v489 = vadd.f32 0.0, %v488
        %v490 = vpop.f32.mrb[0].mxu0
        %491 = vmatprep.mubr.f32.mxu0 0.0
        %492 = vmatmul.mubr.f32.gmra.mrb[0].mxu0 %v363
        %v493 = vpop.f32.mrb[0].mxu0
        %v494 = vadd.f32 0.0, %v493
        %v495 = vpop.f32.mrb[0].mxu0
        %496 = vmatprep.mubr.f32.mxu0 0.0
        %497 = vmatmul.mubr.f32.gmra.mrb[0].mxu0 %v364
        %v498 = vpop.f32.mrb[0].mxu0
        %v499 = vadd.f32 0.0, %v498
        %v500 = vpop.f32.mrb[0].mxu0
        %501 = vmatprep.mubr.f32.mxu0 0.0
        %502 = vmatmul.mubr.f32.gmra.mrb[0].mxu0 %v365
        %v503 = vpop.f32.mrb[0].mxu0
        %v504 = vadd.f32 0.0, %v503
        %v505 = vpop.f32.mrb[0].mxu0
        %506 = vmatprep.mubr.f32.mxu0 0.0
        %507 = vmatmul.mubr.f32.gmra.mrb[0].mxu0 %v366
        %v508 = vpop.f32.mrb[0].mxu0
        %v509 = vadd.f32 0.0, %v508
        %v510 = vpop.f32.mrb[0].mxu0
        %511 = vmatprep.mubr.f32.mxu0 0.0
        %512 = vmatmul.mubr.f32.gmra.mrb[0].mxu0 %v367
        %v513 = vpop.f32.mrb[0].mxu0
        %v514 = vadd.f32 0.0, %v513
        %v515 = vpop.f32.mrb[0].mxu0
        %516 = vmatprep.mubr.f32.mxu0 0.0
        %517 = vmatmul.mubr.f32.gmra.mrb[0].mxu0 %v368
        %v518 = vpop.f32.mrb[0].mxu0
        %v519 = vadd.f32 0.0, %v518
        %v520 = vpop.f32.mrb[0].mxu0
        %521 = vmatprep.mubr.f32.mxu0 0.0
        %522 = vmatmul.mubr.f32.gmra.mrb[0].mxu0 %v369
        %v523 = vpop.f32.mrb[0].mxu0
        %v524 = vadd.f32 0.0, %v523
        %v525 = vpop.f32.mrb[0].mxu0
        %526 = vmatprep.mubr.f32.mxu0 0.0
        %527 = vmatmul.mubr.f32.gmra.mrb[0].mxu0 %v370
        %v528 = vpop.f32.mrb[0].mxu0
        %v529 = vadd.f32 0.0, %v528
        %v530 = vpop.f32.mrb[0].mxu0
        %531 = vmatprep.mubr.f32.mxu0 0.0
        %532 = vmatmul.mubr.f32.gmra.mrb[0].mxu0 %v371
        %v533 = vpop.f32.mrb[0].mxu0
        %v534 = vadd.f32 0.0, %v533
        %v535 = vpop.f32.mrb[0].mxu0
        %536 = vmatprep.mubr.f32.mxu0 0.0
        %537 = vmatmul.mubr.f32.gmra.mrb[0].mxu0 %v372
        %v538 = vpop.f32.mrb[0].mxu0
        %v539 = vadd.f32 0.0, %v538
        %v540 = vpop.f32.mrb[0].mxu0
        %541 = vmatprep.mubr.f32.mxu0 0.0
        %542 = vmatmul.mubr.f32.gmra.mrb[0].mxu0 %v373
        %v543 = vpop.f32.mrb[0].mxu0
        %v544 = vadd.f32 0.0, %v543
        %v545 = vpop.f32.mrb[0].mxu0
        %546 = vmatprep.mubr.f32.mxu0 0.0
        %547 = vmatmul.mubr.f32.gmra.mrb[0].mxu0 %v374
        %v548 = vpop.f32.mrb[0].mxu0
        %v549 = vadd.f32 0.0, %v548
        %v550 = vpop.f32.mrb[0].mxu0
        %551 = vmatprep.mubr.f32.mxu0 0.0
        %552 = vmatmul.mubr.f32.gmra.mrb[0].mxu0 %v375
        %v553 = vpop.f32.mrb[0].mxu0
        %v554 = vadd.f32 0.0, %v553
        %v555 = vpop.f32.mrb[0].mxu0
        %556 = vmatprep.mubr.f32.mxu0 0.0
        %557 = vmatmul.mubr.f32.gmra.mrb[0].mxu0 %v376
        %v558 = vpop.f32.mrb[0].mxu0
        %v559 = vadd.f32 0.0, %v558
        %v560 = vpop.f32.mrb[0].mxu0
        %561 = vmatprep.mubr.f32.mxu0 0.0
        %562 = vmatmul.mubr.f32.gmra.mrb[0].mxu0 %v377
        %v563 = vpop.f32.mrb[0].mxu0
        %v564 = vadd.f32 0.0, %v563
        %v565 = vpop.f32.mrb[0].mxu0
        %566 = vmatprep.mubr.f32.mxu0 0.0
        %567 = vmatmul.mubr.f32.gmra.mrb[0].mxu0 %v378
        %v568 = vpop.f32.mrb[0].mxu0
        %v569 = vadd.f32 0.0, %v568
        %v570 = vpop.f32.mrb[0].mxu0
        %571 = vmatprep.mubr.f32.mxu0 0.0
        %572 = vmatmul.mubr.f32.gmra.mrb[0].mxu0 %v379
        %v573 = vpop.f32.mrb[0].mxu0
        %v574 = vadd.f32 0.0, %v573
        %v575 = vpop.f32.mrb[0].mxu0
        %576 = vmatprep.mubr.f32.mxu0 0.0
        %577 = vmatmul.mubr.f32.gmra.mrb[0].mxu0 %v380
        %v578 = vpop.f32.mrb[0].mxu0
        %v579 = vadd.f32 0.0, %v578
        %v580 = vpop.f32.mrb[0].mxu0
        %581 = vmatprep.mubr.f32.mxu0 0.0
        %582 = vmatmul.mubr.f32.gmra.mrb[0].mxu0 %v381
        %v583 = vpop.f32.mrb[0].mxu0
        %v584 = vadd.f32 0.0, %v583
        %v585 = vpop.f32.mrb[0].mxu0
        %586 = vmatprep.mubr.f32.mxu0 0.0
        %587 = vmatmul.mubr.f32.gmra.mrb[0].mxu0 %v382
        %v588 = vpop.f32.mrb[0].mxu0
        %v589 = vadd.f32 0.0, %v588
        %v590 = vpop.f32.mrb[0].mxu0
        %591 = vmatprep.mubr.f32.mxu0 0.0
        %592 = vmatmul.mubr.f32.gmra.mrb[0].mxu0 %v383
        %v593 = vpop.f32.mrb[0].mxu0
        %v594 = vadd.f32 0.0, %v593
        %v595 = vpop.f32.mrb[0].mxu0
        %596 = vmatprep.mubr.f32.mxu0 0.0
        %597 = vmatmul.mubr.f32.gmra.mrb[0].mxu0 %v384
        %v598 = vpop.f32.mrb[0].mxu0
        %v599 = vadd.f32 0.0, %v598
        %v600 = vpop.f32.mrb[0].mxu0
        %601 = vmatprep.mubr.f32.mxu0 0.0
        %602 = vmatmul.mubr.f32.gmra.mrb[0].mxu0 %v385
        %v603 = vpop.f32.mrb[0].mxu0
        %v604 = vadd.f32 0.0, %v603
        %v605 = vpop.f32.mrb[0].mxu0
        %606 = vmatprep.mubr.f32.mxu0 0.0
        %607 = vmatmul.mubr.f32.gmra.mrb[0].mxu0 %v386
        %v608 = vpop.f32.mrb[0].mxu0
        %v609 = vadd.f32 0.0, %v608
        %v610 = vpop.f32.mrb[0].mxu0
        %611 = vmatprep.mubr.f32.mxu0 0.0
        %612 = vmatmul.mubr.f32.gmra.mrb[0].mxu0 %v387
        %v613 = vpop.f32.mrb[0].mxu0
        %v614 = vadd.f32 0.0, %v613
        %v615 = vpop.f32.mrb[0].mxu0
        %616 = vmatprep.mubr.f32.mxu0 0.0
        %617 = vmatmul.mubr.f32.gmra.mrb[0].mxu0 %v388
        %v618 = vpop.f32.mrb[0].mxu0
        %v619 = vadd.f32 0.0, %v618
        %v620 = vpop.f32.mrb[0].mxu0
        %621 = vmatprep.mubr.f32.mxu0 0.0
        %622 = vmatmul.mubr.f32.gmra.mrb[0].mxu0 %v389
        %v623 = vpop.f32.mrb[0].mxu0
        %v624 = vadd.f32 0.0, %v623
        %v625 = vpop.f32.mrb[0].mxu0
        %626 = vmatprep.mubr.f32.mxu0 0.0
        %627 = vmatmul.mubr.f32.gmra.mrb[0].mxu0 %v390
        %v628 = vpop.f32.mrb[0].mxu0
        %v629 = vadd.f32 0.0, %v628
        %v630 = vpop.f32.mrb[0].mxu0
        %631 = vdwg.mxu0
        %632 = vmax.xlane.f32.xlu0 %v474
        %v633 = vpop.xlane.xlu0 %632
        %634 = vmax.xlane.f32.xlu0 %v479
        %v635 = vpop.xlane.xlu0 %634
        %636 = vmax.xlane.f32.xlu0 %v484
        %v637 = vpop.xlane.xlu0 %636
        %638 = vmax.xlane.f32.xlu0 %v489
        %v639 = vpop.xlane.xlu0 %638
        %640 = vmax.xlane.f32.xlu0 %v494
        %v641 = vpop.xlane.xlu0 %640
        %642 = vmax.xlane.f32.xlu0 %v499
        %v643 = vpop.xlane.xlu0 %642
        %644 = vmax.xlane.f32.xlu0 %v504
        %v645 = vpop.xlane.xlu0 %644
        %646 = vmax.xlane.f32.xlu0 %v509
        %v647 = vpop.xlane.xlu0 %646
        %648 = vmax.xlane.f32.xlu0 %v514
        %v649 = vpop.xlane.xlu0 %648
        %650 = vmax.xlane.f32.xlu0 %v519
        %v651 = vpop.xlane.xlu0 %650
        %652 = vmax.xlane.f32.xlu0 %v524
        %v653 = vpop.xlane.xlu0 %652
        %654 = vmax.xlane.f32.xlu0 %v529
        %v655 = vpop.xlane.xlu0 %654
        %656 = vmax.xlane.f32.xlu0 %v534
        %v657 = vpop.xlane.xlu0 %656
        %658 = vmax.xlane.f32.xlu0 %v539
        %v659 = vpop.xlane.xlu0 %658
        %660 = vmax.xlane.f32.xlu0 %v544
        %v661 = vpop.xlane.xlu0 %660
        %662 = vmax.xlane.f32.xlu0 %v549
        %v663 = vpop.xlane.xlu0 %662
        %664 = vmax.xlane.f32.xlu0 %v554
        %v665 = vpop.xlane.xlu0 %664
        %666 = vmax.xlane.f32.xlu0 %v559
        %v667 = vpop.xlane.xlu0 %666
        %668 = vmax.xlane.f32.xlu0 %v564
        %v669 = vpop.xlane.xlu0 %668
        %670 = vmax.xlane.f32.xlu0 %v569
        %v671 = vpop.xlane.xlu0 %670
        %672 = vmax.xlane.f32.xlu0 %v574
        %v673 = vpop.xlane.xlu0 %672
        %674 = vmax.xlane.f32.xlu0 %v579
        %v675 = vpop.xlane.xlu0 %674
        %676 = vmax.xlane.f32.xlu0 %v584
        %v677 = vpop.xlane.xlu0 %676
        %678 = vmax.xlane.f32.xlu0 %v589
        %v679 = vpop.xlane.xlu0 %678
        %680 = vmax.xlane.f32.xlu0 %v594
        %v681 = vpop.xlane.xlu0 %680
        %682 = vmax.xlane.f32.xlu0 %v599
        %v683 = vpop.xlane.xlu0 %682
        %684 = vmax.xlane.f32.xlu0 %v604
        %v685 = vpop.xlane.xlu0 %684
        %686 = vmax.xlane.f32.xlu0 %v609
        %v687 = vpop.xlane.xlu0 %686
        %688 = vmax.xlane.f32.xlu0 %v614
        %v689 = vpop.xlane.xlu0 %688
        %690 = vmax.xlane.f32.xlu0 %v619
        %v691 = vpop.xlane.xlu0 %690
        %692 = vmax.xlane.f32.xlu0 %v624
        %v693 = vpop.xlane.xlu0 %692
        %694 = vmax.xlane.f32.xlu0 %v629
        %v695 = vpop.xlane.xlu0 %694
        %v696 = vsub.f32 %v474, %v633
        %v697 = vsub.f32 %v479, %v635
        %v698 = vsub.f32 %v484, %v637
        %v699 = vsub.f32 %v489, %v639
        %v700 = vsub.f32 %v494, %v641
        %v701 = vsub.f32 %v499, %v643
        %v702 = vsub.f32 %v504, %v645
        %v703 = vsub.f32 %v509, %v647
        %v704 = vsub.f32 %v514, %v649
        %v705 = vsub.f32 %v519, %v651
        %v706 = vsub.f32 %v524, %v653
        %v707 = vsub.f32 %v529, %v655
        %v708 = vsub.f32 %v534, %v657
        %v709 = vsub.f32 %v539, %v659
        %v710 = vsub.f32 %v544, %v661
        %v711 = vsub.f32 %v549, %v663
        %v712 = vsub.f32 %v554, %v665
        %v713 = vsub.f32 %v559, %v667
        %v714 = vsub.f32 %v564, %v669
        %v715 = vsub.f32 %v569, %v671
        %v716 = vsub.f32 %v574, %v673
        %v717 = vsub.f32 %v579, %v675
        %v718 = vsub.f32 %v584, %v677
        %v719 = vsub.f32 %v589, %v679
        %v720 = vsub.f32 %v594, %v681
        %v721 = vsub.f32 %v599, %v683
        %v722 = vsub.f32 %v604, %v685
        %v723 = vsub.f32 %v609, %v687
        %v724 = vsub.f32 %v614, %v689
        %v725 = vsub.f32 %v619, %v691
        %v726 = vsub.f32 %v624, %v693
        %v727 = vsub.f32 %v629, %v695
        %v728 = vmul.f32 %v696, 1.442695
        %v729 = vpow.pop %v728
        %v730 = vmul.f32 %v697, 1.442695
        %v731 = vpow.pop %v730
        %v732 = vmul.f32 %v698, 1.442695
        %v733 = vpow.pop %v732
        %v734 = vmul.f32 %v699, 1.442695
        %v735 = vpow.pop %v734
        %v736 = vmul.f32 %v700, 1.442695
        %v737 = vpow.pop %v736
        %v738 = vmul.f32 %v701, 1.442695
        %v739 = vpow.pop %v738
        %v740 = vmul.f32 %v702, 1.442695
        %v741 = vpow.pop %v740
        %v742 = vmul.f32 %v703, 1.442695
        %v743 = vpow.pop %v742
        %v744 = vmul.f32 %v704, 1.442695
        %v745 = vpow.pop %v744
        %v746 = vmul.f32 %v705, 1.442695
        %v747 = vpow.pop %v746
        %v748 = vmul.f32 %v706, 1.442695
        %v749 = vpow.pop %v748
        %v750 = vmul.f32 %v707, 1.442695
        %v751 = vpow.pop %v750
        %v752 = vmul.f32 %v708, 1.442695
        %v753 = vpow.pop %v752
        %v754 = vmul.f32 %v709, 1.442695
        %v755 = vpow.pop %v754
        %v756 = vmul.f32 %v710, 1.442695
        %v757 = vpow.pop %v756
        %v758 = vmul.f32 %v711, 1.442695
        %v759 = vpow.pop %v758
        %v760 = vmul.f32 %v712, 1.442695
        %v761 = vpow.pop %v760
        %v762 = vmul.f32 %v713, 1.442695
        %v763 = vpow.pop %v762
        %v764 = vmul.f32 %v714, 1.442695
        %v765 = vpow.pop %v764
        %v766 = vmul.f32 %v715, 1.442695
        %v767 = vpow.pop %v766
        %v768 = vmul.f32 %v716, 1.442695
        %v769 = vpow.pop %v768
        %v770 = vmul.f32 %v717, 1.442695
        %v771 = vpow.pop %v770
        %v772 = vmul.f32 %v718, 1.442695
        %v773 = vpow.pop %v772
        %v774 = vmul.f32 %v719, 1.442695
        %v775 = vpow.pop %v774
        %v776 = vmul.f32 %v720, 1.442695
        %v777 = vpow.pop %v776
        %v778 = vmul.f32 %v721, 1.442695
        %v779 = vpow.pop %v778
        %v780 = vmul.f32 %v722, 1.442695
        %v781 = vpow.pop %v780
        %v782 = vmul.f32 %v723, 1.442695
        %v783 = vpow.pop %v782
        %v784 = vmul.f32 %v724, 1.442695
        %v785 = vpow.pop %v784
        %v786 = vmul.f32 %v725, 1.442695
        %v787 = vpow.pop %v786
        %v788 = vmul.f32 %v726, 1.442695
        %v789 = vpow.pop %v788
        %v790 = vmul.f32 %v727, 1.442695
        %v791 = vpow.pop %v790
        %792 = vadd.xlane.f32.xlu0 %v729
        %v793 = vpop.xlane.xlu0 %792
        %794 = vadd.xlane.f32.xlu0 %v731
        %v795 = vpop.xlane.xlu0 %794
        %796 = vadd.xlane.f32.xlu0 %v733
        %v797 = vpop.xlane.xlu0 %796
        %798 = vadd.xlane.f32.xlu0 %v735
        %v799 = vpop.xlane.xlu0 %798
        %800 = vadd.xlane.f32.xlu0 %v737
        %v801 = vpop.xlane.xlu0 %800
        %802 = vadd.xlane.f32.xlu0 %v739
        %v803 = vpop.xlane.xlu0 %802
        %804 = vadd.xlane.f32.xlu0 %v741
        %v805 = vpop.xlane.xlu0 %804
        %806 = vadd.xlane.f32.xlu0 %v743
        %v807 = vpop.xlane.xlu0 %806
        %808 = vadd.xlane.f32.xlu0 %v745
        %v809 = vpop.xlane.xlu0 %808
        %810 = vadd.xlane.f32.xlu0 %v747
        %v811 = vpop.xlane.xlu0 %810
        %812 = vadd.xlane.f32.xlu0 %v749
        %v813 = vpop.xlane.xlu0 %812
        %814 = vadd.xlane.f32.xlu0 %v751
        %v815 = vpop.xlane.xlu0 %814
        %816 = vadd.xlane.f32.xlu0 %v753
        %v817 = vpop.xlane.xlu0 %816
        %818 = vadd.xlane.f32.xlu0 %v755
        %v819 = vpop.xlane.xlu0 %818
        %820 = vadd.xlane.f32.xlu0 %v757
        %v821 = vpop.xlane.xlu0 %820
        %822 = vadd.xlane.f32.xlu0 %v759
        %v823 = vpop.xlane.xlu0 %822
        %824 = vadd.xlane.f32.xlu0 %v761
        %v825 = vpop.xlane.xlu0 %824
        %826 = vadd.xlane.f32.xlu0 %v763
        %v827 = vpop.xlane.xlu0 %826
        %828 = vadd.xlane.f32.xlu0 %v765
        %v829 = vpop.xlane.xlu0 %828
        %830 = vadd.xlane.f32.xlu0 %v767
        %v831 = vpop.xlane.xlu0 %830
        %832 = vadd.xlane.f32.xlu0 %v769
        %v833 = vpop.xlane.xlu0 %832
        %834 = vadd.xlane.f32.xlu0 %v771
        %v835 = vpop.xlane.xlu0 %834
        %836 = vadd.xlane.f32.xlu0 %v773
        %v837 = vpop.xlane.xlu0 %836
        %838 = vadd.xlane.f32.xlu0 %v775
        %v839 = vpop.xlane.xlu0 %838
        %840 = vadd.xlane.f32.xlu0 %v777
        %v841 = vpop.xlane.xlu0 %840
        %842 = vadd.xlane.f32.xlu0 %v779
        %v843 = vpop.xlane.xlu0 %842
        %844 = vadd.xlane.f32.xlu0 %v781
        %v845 = vpop.xlane.xlu0 %844
        %846 = vadd.xlane.f32.xlu0 %v783
        %v847 = vpop.xlane.xlu0 %846
        %848 = vadd.xlane.f32.xlu0 %v785
        %v849 = vpop.xlane.xlu0 %848
        %850 = vadd.xlane.f32.xlu0 %v787
        %v851 = vpop.xlane.xlu0 %850
        %852 = vadd.xlane.f32.xlu0 %v789
        %v853 = vpop.xlane.xlu0 %852
        %854 = vadd.xlane.f32.xlu0 %v791
        %v855 = vpop.xlane.xlu0 %854
        %v856 = vrcp.pop %v793
        %v857 = vrcp.pop %v795
        %v858 = vrcp.pop %v797
        %v859 = vrcp.pop %v799
        %v860 = vrcp.pop %v801
        %v861 = vrcp.pop %v803
        %v862 = vrcp.pop %v805
        %v863 = vrcp.pop %v807
        %v864 = vrcp.pop %v809
        %v865 = vrcp.pop %v811
        %v866 = vrcp.pop %v813
        %v867 = vrcp.pop %v815
        %v868 = vrcp.pop %v817
        %v869 = vrcp.pop %v819
        %v870 = vrcp.pop %v821
        %v871 = vrcp.pop %v823
        %v872 = vrcp.pop %v825
        %v873 = vrcp.pop %v827
        %v874 = vrcp.pop %v829
        %v875 = vrcp.pop %v831
        %v876 = vrcp.pop %v833
        %v877 = vrcp.pop %v835
        %v878 = vrcp.pop %v837
        %v879 = vrcp.pop %v839
        %v880 = vrcp.pop %v841
        %v881 = vrcp.pop %v843
        %v882 = vrcp.pop %v845
        %v883 = vrcp.pop %v847
        %v884 = vrcp.pop %v849
        %v885 = vrcp.pop %v851
        %v886 = vrcp.pop %v853
        %v887 = vrcp.pop %v855
        %v888 = vmul.f32 %v729, %v856
        %v889 = vmul.f32 %v731, %v857
        %v890 = vmul.f32 %v733, %v858
        %v891 = vmul.f32 %v735, %v859
        %v892 = vmul.f32 %v737, %v860
        %v893 = vmul.f32 %v739, %v861
        %v894 = vmul.f32 %v741, %v862
        %v895 = vmul.f32 %v743, %v863
        %v896 = vmul.f32 %v745, %v864
        %v897 = vmul.f32 %v747, %v865
        %v898 = vmul.f32 %v749, %v866
        %v899 = vmul.f32 %v751, %v867
        %v900 = vmul.f32 %v753, %v868
        %v901 = vmul.f32 %v755, %v869
        %v902 = vmul.f32 %v757, %v870
        %v903 = vmul.f32 %v759, %v871
        %v904 = vmul.f32 %v761, %v872
        %v905 = vmul.f32 %v763, %v873
        %v906 = vmul.f32 %v765, %v874
        %v907 = vmul.f32 %v767, %v875
        %v908 = vmul.f32 %v769, %v876
        %v909 = vmul.f32 %v771, %v877
        %v910 = vmul.f32 %v773, %v878
        %v911 = vmul.f32 %v775, %v879
        %v912 = vmul.f32 %v777, %v880
        %v913 = vmul.f32 %v779, %v881
        %v914 = vmul.f32 %v781, %v882
        %v915 = vmul.f32 %v783, %v883
        %v916 = vmul.f32 %v785, %v884
        %v917 = vmul.f32 %v787, %v885
        %v918 = vmul.f32 %v789, %v886
        %v919 = vmul.f32 %v791, %v887
        %v920 = vld [vmem:[%s284] sm:$0xff]
        %v921 = vld [vmem:[%s284 + $0x8] sm:$0xff]
        %v922 = vld [vmem:[%s284 + $0x10] sm:$0xff]
        %v923 = vld [vmem:[%s284 + $0x18] sm:$0xff]
        %v924 = vld [vmem:[%s284 + $0x20] sm:$0xff]
        %v925 = vld [vmem:[%s284 + $0x28] sm:$0xff]
        %v926 = vld [vmem:[%s284 + $0x30] sm:$0xff]
        %v927 = vld [vmem:[%s284 + $0x38] sm:$0xff]
        %v928 = vld [vmem:[%s284 + $0x40] sm:$0xff]
        %v929 = vld [vmem:[%s284 + $0x48] sm:$0xff]
        %v930 = vld [vmem:[%s284 + $0x50] sm:$0xff]
        %v931 = vld [vmem:[%s284 + $0x58] sm:$0xff]
        %v932 = vld [vmem:[%s284 + $0x60] sm:$0xff]
        %v933 = vld [vmem:[%s284 + $0x68] sm:$0xff]
        %v934 = vld [vmem:[%s284 + $0x70] sm:$0xff]
        %v935 = vld [vmem:[%s284 + $0x78] sm:$0xff]
        %936 = vmatprep.subr.mxu0 0.0
        %937 = vmatpush1.msra.mxu0 %v920
        %938 = vmatprep.subr.mxu0 0.0
        %939 = vmatpush1.msra.mxu0 %v921
        %940 = vmatprep.subr.mxu0 0.0
        %941 = vmatpush1.msra.mxu0 %v922
        %942 = vmatprep.subr.mxu0 0.0
        %943 = vmatpush1.msra.mxu0 %v923
        %944 = vmatprep.subr.mxu0 0.0
        %945 = vmatpush1.msra.mxu0 %v924
        %946 = vmatprep.subr.mxu0 0.0
        %947 = vmatpush1.msra.mxu0 %v925
        %948 = vmatprep.subr.mxu0 0.0
        %949 = vmatpush1.msra.mxu0 %v926
        %950 = vmatprep.subr.mxu0 0.0
        %951 = vmatpush1.msra.mxu0 %v927
        %952 = vmatprep.subr.mxu0 0.0
        %953 = vmatpush1.msra.mxu0 %v928
        %954 = vmatprep.subr.mxu0 0.0
        %955 = vmatpush1.msra.mxu0 %v929
        %956 = vmatprep.subr.mxu0 0.0
        %957 = vmatpush1.msra.mxu0 %v930
        %958 = vmatprep.subr.mxu0 0.0
        %959 = vmatpush1.msra.mxu0 %v931
        %960 = vmatprep.subr.mxu0 0.0
        %961 = vmatpush1.msra.mxu0 %v932
        %962 = vmatprep.subr.mxu0 0.0
        %963 = vmatpush1.msra.mxu0 %v933
        %964 = vmatprep.subr.mxu0 0.0
        %965 = vmatpush1.msra.mxu0 %v934
        %966 = vmatprep.subr.mxu0 0.0
        %967 = vmatpush1.msra.mxu0 %v935
        %968 = vmatprep.subr.mxu0 0.0
        %969 = vmatpush1.msra.mxu0 0.0
        %970 = vmatprep.subr.mxu0 0.0
        %971 = vmatpush1.msra.mxu0 0.0
        %972 = vmatprep.subr.mxu0 0.0
        %973 = vmatpush1.msra.mxu0 0.0
        %974 = vmatprep.subr.mxu0 0.0
        %975 = vmatpush1.msra.mxu0 0.0
        %976 = vmatprep.subr.mxu0 0.0
        %977 = vmatpush1.msra.mxu0 0.0
        %978 = vmatprep.subr.mxu0 0.0
        %979 = vmatpush1.msra.mxu0 0.0
        %980 = vmatprep.subr.mxu0 0.0
        %981 = vmatpush1.msra.mxu0 0.0
        %982 = vmatprep.subr.mxu0 0.0
        %983 = vmatpush1.msra.mxu0 0.0
        %984 = vmatprep.subr.mxu0 0.0
        %985 = vmatpush1.msra.mxu0 0.0
        %986 = vmatprep.subr.mxu0 0.0
        %987 = vmatpush1.msra.mxu0 0.0
        %988 = vmatprep.subr.mxu0 0.0
        %989 = vmatpush1.msra.mxu0 0.0
        %990 = vmatprep.subr.mxu0 0.0
        %991 = vmatpush1.msra.mxu0 0.0
        %992 = vmatprep.subr.mxu0 0.0
        %993 = vmatpush1.msra.mxu0 0.0
        %994 = vmatprep.subr.mxu0 0.0
        %995 = vmatpush1.msra.mxu0 0.0
        %996 = vmatprep.subr.mxu0 0.0
        %997 = vmatpush1.msra.mxu0 0.0
        %998 = vmatprep.subr.mxu0 0.0
        %999 = vmatpush1.msra.mxu0 0.0
        %1000 = vmatprep.mubr.f32.mxu0 0.0
        %1001 = vmatmul.mubr.f32.gmra.mrb[0].mxu0 %v888
        %v1002 = vpop.f32.mrb[0].mxu0
        %v1003 = vadd.f32 0.0, %v1002
        %v1004 = vpop.f32.mrb[0].mxu0
        %1005 = vmatprep.mubr.f32.mxu0 0.0
        %1006 = vmatmul.mubr.f32.gmra.mrb[0].mxu0 %v889
        %v1007 = vpop.f32.mrb[0].mxu0
        %v1008 = vadd.f32 0.0, %v1007
        %v1009 = vpop.f32.mrb[0].mxu0
        %1010 = vmatprep.mubr.f32.mxu0 0.0
        %1011 = vmatmul.mubr.f32.gmra.mrb[0].mxu0 %v890
        %v1012 = vpop.f32.mrb[0].mxu0
        %v1013 = vadd.f32 0.0, %v1012
        %v1014 = vpop.f32.mrb[0].mxu0
        %1015 = vmatprep.mubr.f32.mxu0 0.0
        %1016 = vmatmul.mubr.f32.gmra.mrb[0].mxu0 %v891
        %v1017 = vpop.f32.mrb[0].mxu0
        %v1018 = vadd.f32 0.0, %v1017
        %v1019 = vpop.f32.mrb[0].mxu0
        %1020 = vmatprep.mubr.f32.mxu0 0.0
        %1021 = vmatmul.mubr.f32.gmra.mrb[0].mxu0 %v892
        %v1022 = vpop.f32.mrb[0].mxu0
        %v1023 = vadd.f32 0.0, %v1022
        %v1024 = vpop.f32.mrb[0].mxu0
        %1025 = vmatprep.mubr.f32.mxu0 0.0
        %1026 = vmatmul.mubr.f32.gmra.mrb[0].mxu0 %v893
        %v1027 = vpop.f32.mrb[0].mxu0
        %v1028 = vadd.f32 0.0, %v1027
        %v1029 = vpop.f32.mrb[0].mxu0
        %1030 = vmatprep.mubr.f32.mxu0 0.0
        %1031 = vmatmul.mubr.f32.gmra.mrb[0].mxu0 %v894
        %v1032 = vpop.f32.mrb[0].mxu0
        %v1033 = vadd.f32 0.0, %v1032
        %v1034 = vpop.f32.mrb[0].mxu0
        %1035 = vmatprep.mubr.f32.mxu0 0.0
        %1036 = vmatmul.mubr.f32.gmra.mrb[0].mxu0 %v895
        %v1037 = vpop.f32.mrb[0].mxu0
        %v1038 = vadd.f32 0.0, %v1037
        %v1039 = vpop.f32.mrb[0].mxu0
        %1040 = vmatprep.mubr.f32.mxu0 0.0
        %1041 = vmatmul.mubr.f32.gmra.mrb[0].mxu0 %v896
        %v1042 = vpop.f32.mrb[0].mxu0
        %v1043 = vadd.f32 0.0, %v1042
        %v1044 = vpop.f32.mrb[0].mxu0
        %1045 = vmatprep.mubr.f32.mxu0 0.0
        %1046 = vmatmul.mubr.f32.gmra.mrb[0].mxu0 %v897
        %v1047 = vpop.f32.mrb[0].mxu0
        %v1048 = vadd.f32 0.0, %v1047
        %v1049 = vpop.f32.mrb[0].mxu0
        %1050 = vmatprep.mubr.f32.mxu0 0.0
        %1051 = vmatmul.mubr.f32.gmra.mrb[0].mxu0 %v898
        %v1052 = vpop.f32.mrb[0].mxu0
        %v1053 = vadd.f32 0.0, %v1052
        %v1054 = vpop.f32.mrb[0].mxu0
        %1055 = vmatprep.mubr.f32.mxu0 0.0
        %1056 = vmatmul.mubr.f32.gmra.mrb[0].mxu0 %v899
        %v1057 = vpop.f32.mrb[0].mxu0
        %v1058 = vadd.f32 0.0, %v1057
        %v1059 = vpop.f32.mrb[0].mxu0
        %1060 = vmatprep.mubr.f32.mxu0 0.0
        %1061 = vmatmul.mubr.f32.gmra.mrb[0].mxu0 %v900
        %v1062 = vpop.f32.mrb[0].mxu0
        %v1063 = vadd.f32 0.0, %v1062
        %v1064 = vpop.f32.mrb[0].mxu0
        %1065 = vmatprep.mubr.f32.mxu0 0.0
        %1066 = vmatmul.mubr.f32.gmra.mrb[0].mxu0 %v901
        %v1067 = vpop.f32.mrb[0].mxu0
        %v1068 = vadd.f32 0.0, %v1067
        %v1069 = vpop.f32.mrb[0].mxu0
        %1070 = vmatprep.mubr.f32.mxu0 0.0
        %1071 = vmatmul.mubr.f32.gmra.mrb[0].mxu0 %v902
        %v1072 = vpop.f32.mrb[0].mxu0
        %v1073 = vadd.f32 0.0, %v1072
        %v1074 = vpop.f32.mrb[0].mxu0
        %1075 = vmatprep.mubr.f32.mxu0 0.0
        %1076 = vmatmul.mubr.f32.gmra.mrb[0].mxu0 %v903
        %v1077 = vpop.f32.mrb[0].mxu0
        %v1078 = vadd.f32 0.0, %v1077
        %v1079 = vpop.f32.mrb[0].mxu0
        %1080 = vmatprep.mubr.f32.mxu0 0.0
        %1081 = vmatmul.mubr.f32.gmra.mrb[0].mxu0 %v904
        %v1082 = vpop.f32.mrb[0].mxu0
        %v1083 = vadd.f32 0.0, %v1082
        %v1084 = vpop.f32.mrb[0].mxu0
        %1085 = vmatprep.mubr.f32.mxu0 0.0
        %1086 = vmatmul.mubr.f32.gmra.mrb[0].mxu0 %v905
        %v1087 = vpop.f32.mrb[0].mxu0
        %v1088 = vadd.f32 0.0, %v1087
        %v1089 = vpop.f32.mrb[0].mxu0
        %1090 = vmatprep.mubr.f32.mxu0 0.0
        %1091 = vmatmul.mubr.f32.gmra.mrb[0].mxu0 %v906
        %v1092 = vpop.f32.mrb[0].mxu0
        %v1093 = vadd.f32 0.0, %v1092
        %v1094 = vpop.f32.mrb[0].mxu0
        %1095 = vmatprep.mubr.f32.mxu0 0.0
        %1096 = vmatmul.mubr.f32.gmra.mrb[0].mxu0 %v907
        %v1097 = vpop.f32.mrb[0].mxu0
        %v1098 = vadd.f32 0.0, %v1097
        %v1099 = vpop.f32.mrb[0].mxu0
        %1100 = vmatprep.mubr.f32.mxu0 0.0
        %1101 = vmatmul.mubr.f32.gmra.mrb[0].mxu0 %v908
        %v1102 = vpop.f32.mrb[0].mxu0
        %v1103 = vadd.f32 0.0, %v1102
        %v1104 = vpop.f32.mrb[0].mxu0
        %1105 = vmatprep.mubr.f32.mxu0 0.0
        %1106 = vmatmul.mubr.f32.gmra.mrb[0].mxu0 %v909
        %v1107 = vpop.f32.mrb[0].mxu0
        %v1108 = vadd.f32 0.0, %v1107
        %v1109 = vpop.f32.mrb[0].mxu0
        %1110 = vmatprep.mubr.f32.mxu0 0.0
        %1111 = vmatmul.mubr.f32.gmra.mrb[0].mxu0 %v910
        %v1112 = vpop.f32.mrb[0].mxu0
        %v1113 = vadd.f32 0.0, %v1112
        %v1114 = vpop.f32.mrb[0].mxu0
        %1115 = vmatprep.mubr.f32.mxu0 0.0
        %1116 = vmatmul.mubr.f32.gmra.mrb[0].mxu0 %v911
        %v1117 = vpop.f32.mrb[0].mxu0
        %v1118 = vadd.f32 0.0, %v1117
        %v1119 = vpop.f32.mrb[0].mxu0
        %1120 = vmatprep.mubr.f32.mxu0 0.0
        %1121 = vmatmul.mubr.f32.gmra.mrb[0].mxu0 %v912
        %v1122 = vpop.f32.mrb[0].mxu0
        %v1123 = vadd.f32 0.0, %v1122
        %v1124 = vpop.f32.mrb[0].mxu0
        %1125 = vmatprep.mubr.f32.mxu0 0.0
        %1126 = vmatmul.mubr.f32.gmra.mrb[0].mxu0 %v913
        %v1127 = vpop.f32.mrb[0].mxu0
        %v1128 = vadd.f32 0.0, %v1127
        %v1129 = vpop.f32.mrb[0].mxu0
        %1130 = vmatprep.mubr.f32.mxu0 0.0
        %1131 = vmatmul.mubr.f32.gmra.mrb[0].mxu0 %v914
        %v1132 = vpop.f32.mrb[0].mxu0
        %v1133 = vadd.f32 0.0, %v1132
        %v1134 = vpop.f32.mrb[0].mxu0
        %1135 = vmatprep.mubr.f32.mxu0 0.0
        %1136 = vmatmul.mubr.f32.gmra.mrb[0].mxu0 %v915
        %v1137 = vpop.f32.mrb[0].mxu0
        %v1138 = vadd.f32 0.0, %v1137
        %v1139 = vpop.f32.mrb[0].mxu0
        %1140 = vmatprep.mubr.f32.mxu0 0.0
        %1141 = vmatmul.mubr.f32.gmra.mrb[0].mxu0 %v916
        %v1142 = vpop.f32.mrb[0].mxu0
        %v1143 = vadd.f32 0.0, %v1142
        %v1144 = vpop.f32.mrb[0].mxu0
        %1145 = vmatprep.mubr.f32.mxu0 0.0
        %1146 = vmatmul.mubr.f32.gmra.mrb[0].mxu0 %v917
        %v1147 = vpop.f32.mrb[0].mxu0
        %v1148 = vadd.f32 0.0, %v1147
        %v1149 = vpop.f32.mrb[0].mxu0
        %1150 = vmatprep.mubr.f32.mxu0 0.0
        %1151 = vmatmul.mubr.f32.gmra.mrb[0].mxu0 %v918
        %v1152 = vpop.f32.mrb[0].mxu0
        %v1153 = vadd.f32 0.0, %v1152
        %v1154 = vpop.f32.mrb[0].mxu0
        %1155 = vmatprep.mubr.f32.mxu0 0.0
        %1156 = vmatmul.mubr.f32.gmra.mrb[0].mxu0 %v919
        %v1157 = vpop.f32.mrb[0].mxu0
        %v1158 = vadd.f32 0.0, %v1157
        %v1159 = vpop.f32.mrb[0].mxu0
        %1160 = vdwg.mxu0
        %1161 = vst [vmem:[%s316] sm:$0xff] %v1003
        %1162 = vst [vmem:[%s316 + $0x8] sm:$0xff] %v1008
        %1163 = vst [vmem:[%s316 + $0x10] sm:$0xff] %v1013
        %1164 = vst [vmem:[%s316 + $0x18] sm:$0xff] %v1018
        %1165 = vst [vmem:[%s316 + $0x20] sm:$0xff] %v1023
        %1166 = vst [vmem:[%s316 + $0x28] sm:$0xff] %v1028
        %1167 = vst [vmem:[%s316 + $0x30] sm:$0xff] %v1033
        %1168 = vst [vmem:[%s316 + $0x38] sm:$0xff] %v1038
        %1169 = vst [vmem:[%s316 + $0x40] sm:$0xff] %v1043
        %1170 = vst [vmem:[%s316 + $0x48] sm:$0xff] %v1048
        %1171 = vst [vmem:[%s316 + $0x50] sm:$0xff] %v1053
        %1172 = vst [vmem:[%s316 + $0x58] sm:$0xff] %v1058
        %1173 = vst [vmem:[%s316 + $0x60] sm:$0xff] %v1063
        %1174 = vst [vmem:[%s316 + $0x68] sm:$0xff] %v1068
        %1175 = vst [vmem:[%s316 + $0x70] sm:$0xff] %v1073
        %1176 = vst [vmem:[%s316 + $0x78] sm:$0xff] %v1078
        %1177 = vst [vmem:[%s316 + $0x80] sm:$0xff] %v1083
        %1178 = vst [vmem:[%s316 + $0x88] sm:$0xff] %v1088
        %1179 = vst [vmem:[%s316 + $0x90] sm:$0xff] %v1093
        %1180 = vst [vmem:[%s316 + $0x98] sm:$0xff] %v1098
        %1181 = vst [vmem:[%s316 + $0xa0] sm:$0xff] %v1103
        %1182 = vst [vmem:[%s316 + $0xa8] sm:$0xff] %v1108
        %1183 = vst [vmem:[%s316 + $0xb0] sm:$0xff] %v1113
        %1184 = vst [vmem:[%s316 + $0xb8] sm:$0xff] %v1118
        %1185 = vst [vmem:[%s316 + $0xc0] sm:$0xff] %v1123
        %1186 = vst [vmem:[%s316 + $0xc8] sm:$0xff] %v1128
        %1187 = vst [vmem:[%s316 + $0xd0] sm:$0xff] %v1133
        %1188 = vst [vmem:[%s316 + $0xd8] sm:$0xff] %v1138
        %1189 = vst [vmem:[%s316 + $0xe0] sm:$0xff] %v1143
        %1190 = vst [vmem:[%s316 + $0xe8] sm:$0xff] %v1148
        %1191 = vst [vmem:[%s316 + $0xf0] sm:$0xff] %v1153
        %1192 = vst [vmem:[%s316 + $0xf8] sm:$0xff] %v1158
        %1193 = vst [vmem:[%s323] sm:$0xff] %v888
        %1194 = vst [vmem:[%s323 + $0x8] sm:$0xff] %v889
        %1195 = vst [vmem:[%s323 + $0x10] sm:$0xff] %v890
        %1196 = vst [vmem:[%s323 + $0x18] sm:$0xff] %v891
        %1197 = vst [vmem:[%s323 + $0x20] sm:$0xff] %v892
        %1198 = vst [vmem:[%s323 + $0x28] sm:$0xff] %v893
        %1199 = vst [vmem:[%s323 + $0x30] sm:$0xff] %v894
        %1200 = vst [vmem:[%s323 + $0x38] sm:$0xff] %v895
        %1201 = vst [vmem:[%s323 + $0x40] sm:$0xff] %v896
        %1202 = vst [vmem:[%s323 + $0x48] sm:$0xff] %v897
        %1203 = vst [vmem:[%s323 + $0x50] sm:$0xff] %v898
        %1204 = vst [vmem:[%s323 + $0x58] sm:$0xff] %v899
        %1205 = vst [vmem:[%s323 + $0x60] sm:$0xff] %v900
        %1206 = vst [vmem:[%s323 + $0x68] sm:$0xff] %v901
        %1207 = vst [vmem:[%s323 + $0x70] sm:$0xff] %v902
        %1208 = vst [vmem:[%s323 + $0x78] sm:$0xff] %v903
        %1209 = vst [vmem:[%s323 + $0x80] sm:$0xff] %v904
        %1210 = vst [vmem:[%s323 + $0x88] sm:$0xff] %v905
        %1211 = vst [vmem:[%s323 + $0x90] sm:$0xff] %v906
        %1212 = vst [vmem:[%s323 + $0x98] sm:$0xff] %v907
        %1213 = vst [vmem:[%s323 + $0xa0] sm:$0xff] %v908
        %1214 = vst [vmem:[%s323 + $0xa8] sm:$0xff] %v909
        %1215 = vst [vmem:[%s323 + $0xb0] sm:$0xff] %v910
        %1216 = vst [vmem:[%s323 + $0xb8] sm:$0xff] %v911
        %1217 = vst [vmem:[%s323 + $0xc0] sm:$0xff] %v912
        %1218 = vst [vmem:[%s323 + $0xc8] sm:$0xff] %v913
        %1219 = vst [vmem:[%s323 + $0xd0] sm:$0xff] %v914
        %1220 = vst [vmem:[%s323 + $0xd8] sm:$0xff] %v915
        %1221 = vst [vmem:[%s323 + $0xe0] sm:$0xff] %v916
        %1222 = vst [vmem:[%s323 + $0xe8] sm:$0xff] %v917
        %1223 = vst [vmem:[%s323 + $0xf0] sm:$0xff] %v918
        %1224 = vst [vmem:[%s323 + $0xf8] sm:$0xff] %v919
        %s1225 = sand.u32 %s130, 1
        %s1226 = scalar_lea.sflag [#allocation4], %s1225
        %s1227 = sand.u32 %s130, 1
        %s1228 = smul.addr %s1227, 256
        %s1229 = scalar_lea.vmem [#allocation8], %s1228
        %s1230 = sand.u32 %s158, 1
        %s1231 = scalar_lea.sflag [#allocation10], %s1230
        %s1232 = sand.u32 %s158, 1
        %s1233 = smul.addr %s1232, 256
        %s1234 = scalar_lea.vmem [#allocation9], %s1233
        // Predicated region
        $region45: #{tpu_custom_call.1} parent=31 // pred_check
          %p1235 = pneg %p140
        $region46: #{tpu_custom_call.1} parent=31 // pred_check_branch
          %1237 = sbr.rel (%p1235) target = $region48
        $region47: #{tpu_custom_call.1} parent=31 // pred_region
          %s1238 = smul.u32 32, %s33
          %s1240 = ssub.s32 4096, 4096
          %1241 = vsyncadd %s1226, %s1240
          %s1242 = smul.addr %s32, 32
          %s1243 = sadd.s32 %s1238, %s1242
          %s1244 = smul.addr %s1243, 128
          %s1245 = scalar_lea.hbm %s3, %s1244
          %s1246 = sshll.u32 %s1229, 4
          %s1247 = int_to_ptr.vmem [resolvable:$true] %s1246
          %1252 = dma.vmem_to_hbm [thread:$0]  %s1247, 4096, %s1245, %s1226, 128, 128, 8
        $region48: #{tpu_custom_call.1} parent=31 // pred_fallthru
          _
        // Predicated region
        $region49: #{tpu_custom_call.1} parent=31 // pred_check
          %p1253 = pneg %p168
        $region50: #{tpu_custom_call.1} parent=31 // pred_check_branch
          %1255 = sbr.rel (%p1253) target = $region52
        $region51: #{tpu_custom_call.1} parent=31 // pred_region
          %s1256 = smul.u32 32, %s33
          %s1258 = ssub.s32 4096, 4096
          %1259 = vsyncadd %s1231, %s1258
          %s1260 = smul.addr %s32, 32
          %s1261 = sadd.s32 %s1256, %s1260
          %s1262 = smul.addr %s1261, 128
          %s1263 = scalar_lea.hbm %s4, %s1262
          %s1264 = sshll.u32 %s1234, 4
          %s1265 = int_to_ptr.vmem [resolvable:$true] %s1264
          %1270 = dma.vmem_to_hbm [thread:$0]  %s1265, 4096, %s1263, %s1231, 128, 128, 8
        $region52: #{tpu_custom_call.1} parent=31 // pred_fallthru
          _
      $region32: #{tpu_custom_call.1} parent=5 // pred_fallthru
        _
      %p1271 = scmp.le.s32.totalorder 2, %s23
      // Predicated region
      $region53: #{tpu_custom_call.1} parent=5 // pred_check
        %p1272 = pneg %p1271
      $region54: #{tpu_custom_call.1} parent=5 // pred_check_branch
        %1274 = sbr.rel (%p1272) target = $region56
      $region55: #{tpu_custom_call.1} parent=5 // pred_region
        %s1275 = ssub.s32 %s23, 2
        // Predicated region
        $region57: #{tpu_custom_call.1} parent=55 // pred_check
          %p1276 = pneg %p146
        $region58: #{tpu_custom_call.1} parent=55 // pred_check_branch
          %1278 = sbr.rel (%p1276) target = $region60
        $region59: #{tpu_custom_call.1} parent=55 // pred_region
          %s1279 = sand.u32 %s131, 1
          %s1280 = scalar_lea.sflag [#allocation4], %s1279
          %s1281 = sand.u32 %s131, 1
          %s1282 = smul.addr %s1281, 256
          %s1283 = scalar_lea.vmem [#allocation8], %s1282
          %1284 = dma.done %s1280, 4096
        $region60: #{tpu_custom_call.1} parent=55 // pred_fallthru
          _
        // Predicated region
        $region61: #{tpu_custom_call.1} parent=55 // pred_check
          %p1285 = pneg %p174
        $region62: #{tpu_custom_call.1} parent=55 // pred_check_branch
          %1287 = sbr.rel (%p1285) target = $region64
        $region63: #{tpu_custom_call.1} parent=55 // pred_region
          %s1288 = sand.u32 %s159, 1
          %s1289 = scalar_lea.sflag [#allocation10], %s1288
          %s1290 = sand.u32 %s159, 1
          %s1291 = smul.addr %s1290, 256
          %s1292 = scalar_lea.vmem [#allocation9], %s1291
          %1293 = dma.done %s1289, 4096
        $region64: #{tpu_custom_call.1} parent=55 // pred_fallthru
          _
      $region56: #{tpu_custom_call.1} parent=5 // pred_fallthru
        _
    $region6: #{tpu_custom_call.1} parent=1 // loop_footer
      %s27 = sadd.s32 1, %s23
    $region7: #{tpu_custom_call.1} parent=1 // loop_footer_branch
      %22 = sbr.rel target = $region3
    $region8: #{tpu_custom_call.1} parent=1 // loop_exit
      _
    %1294 = vsyncpa [#allocation3], 1
    %s1295 = scalar_lea.sflag [#allocation3], 1
    %1296 = vsyncpa %s1295, 1
    %1297 = vsyncpa [#allocation6], 1
    %s1298 = scalar_lea.sflag [#allocation6], 1
    %1299 = vsyncpa %s1298, 1
    %1300 = vsyncpa [#allocation4], 1
    %s1301 = scalar_lea.sflag [#allocation4], 1
    %1302 = vsyncpa %s1301, 1
    %1303 = vsyncpa [#allocation10], 1
    %s1304 = scalar_lea.sflag [#allocation10], 1
    %1305 = vsyncpa %s1304, 1

</llo_original>
